<compile_context>
chip_gen: v7x
topology: tpu7x:2x2x1
jax: 0.10.0
libtpu: 0.0.40
codegen_flags: <defaults>
</compile_context>

<pallas_src>
import jax
import jax.numpy as jnp
from jax.experimental import pallas as pl
from jax.experimental.pallas import tpu as pltpu


def _pad_channel(n):
    """Lane-dense channel padding: 128 minimum (lane width / v5e MXU); align to 256 only
    when the width is already large, so a tile drives the full 2x256^2 MXU on v6e/v7x
    without wasting MACs at small widths (e.g. Cout=32 stays at 128)."""
    if n <= 128:
        return 128
    return ((n + 255) // 256) * 256


def _pick_images_per_step(n_images, hw):
    """Images per grid step: amortize the ~0.35us/step pipeline overhead while keeping
    >= 2 grid steps (v7x has 2 TensorCores) and a modest per-step f32 feature slab."""
    best = 1
    for b in range(1, n_images + 1):
        if n_images % b:
            continue
        if n_images >= 2 and n_images // b < 2:
            continue                      # keep both v7x TCs busy
        if b * hw > 2048:                 # cap per-step M (bounds the f32 feat slab in VMEM)
            continue
        best = b
    return best


# ----------------------------------------------------------------------------
# Fused kernel: conv3x3 (single K=9*Cin matmul on an in-VMEM patch slab)
#               + BN shift + ReLU + global avg pool (XLU sum) + Linear head.
# One grid step == B images.
# ----------------------------------------------------------------------------
def fused_extractor_head_kernel(x_ref, w_ref, shift_ref, wh_ref, bh_ref, o_ref):
    # x_ref:     (B, Hp, Wp, Cin)   bf16  -- B spatially padded NHWC images
    # w_ref:     (9*Cin, Coutp)     bf16  -- conv weights (kh,kw,Cin flattened), BN scale folded
    # shift_ref: (1, Coutp)         f32   -- beta - mean*scale (0 on padded channels)
    # wh_ref:    (Coutp, CLSp)      bf16  -- head weights with 1/HW pool factor folded in
    # bh_ref:    (1, CLSp)          f32   -- head bias (zeros on padded classes)
    # o_ref:     (1, B, CLSp)       bf16  -- logits for these B images
    B, Hp, Wp, Cin = x_ref.shape
    H, W = Hp - 2, Wp - 2
    HW = H * W

    x = x_ref[...]                                         # (B, Hp, Wp, Cin) bf16

    # im2col fused in VMEM, built exactly once: concatenate the nine shifted windows along
    # the channel axis -> (B*HW, 9*Cin) patch slab, then ONE MXU matmul with K = 9*Cin
    # (column order (dh,dw,c) matches the wrapper-side weight reshape).
    windows = [x[:, dh:dh + H, dw:dw + W, :]
               for dh in range(3) for dw in range(3)]      # nine (B, H, W, Cin)
    patches = jnp.concatenate(windows, axis=-1).reshape(B * HW, 9 * Cin)

    conv = jnp.dot(patches, w_ref[...],
                   preferred_element_type=jnp.float32)     # (B*HW, Coutp) f32

    # BatchNorm shift (scale already folded into w) + ReLU, kept in f32 (v5e has no bf16 VPU).
    feat = jnp.maximum(conv + shift_ref[...], 0.0)         # (B*HW, Coutp) f32

    # Global average pool as an XLU sublane sum; the 1/HW factor is folded into wh.
    pooled = feat.reshape(B, HW, -1).sum(axis=1)           # (B, Coutp) f32

    # Linear head (autocast: bf16 operands, f32 accumulation).
    logits = jnp.dot(pooled.astype(jnp.bfloat16), wh_ref[...],
                     preferred_element_type=jnp.float32) + bh_ref[...]   # (B, CLSp) f32
    o_ref[...] = logits[None].astype(o_ref.dtype)          # (1, B, CLSp) bf16


# ----------------------------------------------------------------------------
# Wrapper: layout transpose, padding, BN / pool folding, pallas_call
# ----------------------------------------------------------------------------
def extractor_head_forward(x_nchw, params, *, eps=1e-5):
    """ExtractorHead.forward: head(ext(x)) under autocast (bf16 matmuls, f32 accumulate)."""
    N, Cin, H, W = x_nchw.shape
    Cout = params["conv_w"].shape[0]
    classes = params["lin_w"].shape[0]
    HW = H * W
    Hp, Wp = H + 2, W + 2
    KC = 9 * Cin
    Coutp = _pad_channel(Cout)            # lane-dense conv/pool channel dim
    CLSp = _pad_channel(classes)          # lane-dense head output slab (unmasked lane stores)

    B = _pick_images_per_step(N, HW)      # images per grid step
    n_grid = N // B

    # NCHW -> NHWC, pad spatially by 1 (conv padding), cast activations to bf16.
    x = jnp.transpose(x_nchw, (0, 2, 3, 1))
    xp = jnp.pad(x, ((0, 0), (1, 1), (1, 1), (0, 0))).astype(jnp.bfloat16)   # (N,Hp,Wp,Cin)

    # Fold BN scale into the conv weights (in f32, before the bf16 cast); pass shift only.
    scale = params["bn_gamma"] / jnp.sqrt(params["bn_var"] + eps)            # (Cout,)
    shift = params["bn_beta"] - params["bn_mean"] * scale                    # (Cout,)
    # PyTorch conv weight (Cout, Cin, kh, kw) -> (kh, kw, Cin, Cout) -> (9*Cin, Cout).
    w = jnp.transpose(params["conv_w"], (2, 3, 1, 0)).reshape(KC, Cout) * scale[None, :]
    w = jnp.pad(w, ((0, 0), (0, Coutp - Cout))).astype(jnp.bfloat16)         # (KC, Coutp)
    shift_p = jnp.pad(shift, (0, Coutp - Cout)).astype(jnp.float32)[None, :]  # (1, Coutp)

    # Head Linear: (classes, Cout) -> (Coutp, CLSp), zero-padded, with the 1/HW global
    # average-pool factor folded in (the kernel pools with a plain sum).
    wh = jnp.transpose(params["lin_w"]) * (1.0 / HW)                          # (Cout, classes)
    wh = jnp.pad(wh, ((0, Coutp - Cout), (0, CLSp - classes))).astype(jnp.bfloat16)
    bh = jnp.pad(params["lin_b"], (0, CLSp - classes)).astype(jnp.float32)[None, :]

    out = pl.pallas_call(
        fused_extractor_head_kernel,
        out_shape=jax.ShapeDtypeStruct((n_grid, B, CLSp), jnp.bfloat16),
        grid_spec=pltpu.PrefetchScalarGridSpec(
            num_scalar_prefetch=0,
            grid=(n_grid,),                                            # B images per step
            in_specs=[
                pl.BlockSpec((B, Hp, Wp, Cin), lambda n: (n, 0, 0, 0)),  # images (pipelined)
                pl.BlockSpec((KC, Coutp), lambda n: (0, 0)),             # conv W  (resident)
                pl.BlockSpec((1, Coutp), lambda n: (0, 0)),              # BN shift (resident)
                pl.BlockSpec((Coutp, CLSp), lambda n: (0, 0)),           # head W  (resident)
                pl.BlockSpec((1, CLSp), lambda n: (0, 0)),               # head b  (resident)
            ],
            out_specs=pl.BlockSpec((1, B, CLSp), lambda n: (n, 0, 0)),
        ),
        compiler_params=pltpu.CompilerParams(
            dimension_semantics=("parallel",),   # >=2 grid steps -> both v7x TCs get work
        ),
    )(xp, w, shift_p, wh, bh)

    return out.reshape(N, CLSp)[:, :classes]                            # (N, classes) bf16


# ----------------------------------------------------------------------------
# Pure-JAX reference (f32) for the sanity check
# ----------------------------------------------------------------------------
def reference_forward(x_nchw, params, *, eps=1e-5):
    N, Cin, H, W = x_nchw.shape
    x = jnp.transpose(x_nchw, (0, 2, 3, 1))
    xp = jnp.pad(x, ((0, 0), (1, 1), (1, 1), (0, 0)))
    cols = [xp[:, dh:dh + H, dw:dw + W, :] for dh in range(3) for dw in range(3)]
    patches = jnp.stack(cols, axis=-2).reshape(N * H * W, 9 * Cin)
    wmat = jnp.transpose(params["conv_w"], (2, 3, 1, 0)).reshape(9 * Cin, -1)
    y = patches @ wmat
    scale = params["bn_gamma"] / jnp.sqrt(params["bn_var"] + eps)
    shift = params["bn_beta"] - params["bn_mean"] * scale
    y = jnp.maximum(y * scale + shift, 0.0)
    Cout = y.shape[1]
    pooled = y.reshape(N, H * W, Cout).mean(axis=1)
    return pooled @ params["lin_w"].T + params["lin_b"]


if __name__ == "__main__":
    key = jax.random.PRNGKey(0)
    N, Cin, H, W = 2, 4, 16, 16
    Cout, classes = 32, 4

    k_x, k_w, k_g, k_b, k_m, k_v, k_lw, k_lb = jax.random.split(key, 8)
    x = jax.random.normal(k_x, (N, Cin, H, W), dtype=jnp.float32)   # NCHW like PyTorch
    params = {
        "conv_w":  jax.random.normal(k_w, (Cout, Cin, 3, 3), jnp.float32) * 0.1,
        "bn_gamma": 1.0 + 0.1 * jax.random.normal(k_g, (Cout,), jnp.float32),
        "bn_beta":  0.1 * jax.random.normal(k_b, (Cout,), jnp.float32),
        "bn_mean":  0.1 * jax.random.normal(k_m, (Cout,), jnp.float32),
        "bn_var":   jnp.abs(jax.random.normal(k_v, (Cout,), jnp.float32)) + 0.5,
        "lin_w":   jax.random.normal(k_lw, (classes, Cout), jnp.float32) * 0.1,
        "lin_b":   0.01 * jax.random.normal(k_lb, (classes,), jnp.float32),
    }

    out = jax.block_until_ready(extractor_head_forward(x, params))
    ref = jax.block_until_ready(reference_forward(x, params))

    assert out.shape == (N, classes) and out.dtype == jnp.bfloat16
    err = jnp.max(jnp.abs(out.astype(jnp.float32) - ref))
    assert err < 5e-2, f"max abs err {err}"
    print("KERNEL_OK")
</pallas_src>

<mosaic_0001>
module attributes {stable_mosaic.version = 11 : i64} {
  func.func @fused_extractor_head_kernel(%arg0: i32, %arg1: memref<1x18x18x4xbf16, #tpu.memory_space<vmem>>, %arg2: memref<36x128xbf16, #tpu.memory_space<vmem>>, %arg3: memref<1x128xf32, #tpu.memory_space<vmem>>, %arg4: memref<128x128xbf16, #tpu.memory_space<vmem>>, %arg5: memref<1x128xf32, #tpu.memory_space<vmem>>, %arg6: memref<1x1x128xbf16, #tpu.memory_space<vmem>>) attributes {dimension_semantics = [#tpu.dimension_semantics<parallel>], iteration_bounds = array<i64: 2>, scalar_prefetch = 0 : i64, scratch_operands = 0 : i64, tpu.core_type = #tpu.core_type<tc>, window_params = [{transform_indices = @transform_0, window_bounds = array<i64: 1, 18, 18, 4>}, {pipeline_mode = #tpu.pipeline_mode<synchronous>, transform_indices = @transform_1, window_bounds = array<i64: 36, 128>}, {pipeline_mode = #tpu.pipeline_mode<synchronous>, transform_indices = @transform_2, window_bounds = array<i64: 1, 128>}, {pipeline_mode = #tpu.pipeline_mode<synchronous>, transform_indices = @transform_3, window_bounds = array<i64: 128, 128>}, {pipeline_mode = #tpu.pipeline_mode<synchronous>, transform_indices = @transform_4, window_bounds = array<i64: 1, 128>}, {transform_indices = @transform_5, window_bounds = array<i64: 1, 1, 128>}]} {
    %c0 = arith.constant 0 : index
    %c0_0 = arith.constant 0 : index
    %c0_1 = arith.constant 0 : index
    %c0_2 = arith.constant 0 : index
    %0 = vector.load %arg1[%c0, %c0_0, %c0_1, %c0_2] : memref<1x18x18x4xbf16, #tpu.memory_space<vmem>>, vector<1x18x18x4xbf16>
    %1 = vector.extract_strided_slice %0 {offsets = [0, 0, 0, 0], sizes = [1, 16, 16, 4], strides = [1, 1, 1, 1]} : vector<1x18x18x4xbf16> to vector<1x16x16x4xbf16>
    %2 = vector.extract_strided_slice %0 {offsets = [0, 0, 1, 0], sizes = [1, 16, 16, 4], strides = [1, 1, 1, 1]} : vector<1x18x18x4xbf16> to vector<1x16x16x4xbf16>
    %3 = vector.extract_strided_slice %0 {offsets = [0, 0, 2, 0], sizes = [1, 16, 16, 4], strides = [1, 1, 1, 1]} : vector<1x18x18x4xbf16> to vector<1x16x16x4xbf16>
    %4 = vector.extract_strided_slice %0 {offsets = [0, 1, 0, 0], sizes = [1, 16, 16, 4], strides = [1, 1, 1, 1]} : vector<1x18x18x4xbf16> to vector<1x16x16x4xbf16>
    %5 = vector.extract_strided_slice %0 {offsets = [0, 1, 1, 0], sizes = [1, 16, 16, 4], strides = [1, 1, 1, 1]} : vector<1x18x18x4xbf16> to vector<1x16x16x4xbf16>
    %6 = vector.extract_strided_slice %0 {offsets = [0, 1, 2, 0], sizes = [1, 16, 16, 4], strides = [1, 1, 1, 1]} : vector<1x18x18x4xbf16> to vector<1x16x16x4xbf16>
    %7 = vector.extract_strided_slice %0 {offsets = [0, 2, 0, 0], sizes = [1, 16, 16, 4], strides = [1, 1, 1, 1]} : vector<1x18x18x4xbf16> to vector<1x16x16x4xbf16>
    %8 = vector.extract_strided_slice %0 {offsets = [0, 2, 1, 0], sizes = [1, 16, 16, 4], strides = [1, 1, 1, 1]} : vector<1x18x18x4xbf16> to vector<1x16x16x4xbf16>
    %9 = vector.extract_strided_slice %0 {offsets = [0, 2, 2, 0], sizes = [1, 16, 16, 4], strides = [1, 1, 1, 1]} : vector<1x18x18x4xbf16> to vector<1x16x16x4xbf16>
    %10 = tpu.concatenate %1, %2, %3, %4, %5, %6, %7, %8, %9 in 3 : vector<1x16x16x4xbf16>, vector<1x16x16x4xbf16>, vector<1x16x16x4xbf16>, vector<1x16x16x4xbf16>, vector<1x16x16x4xbf16>, vector<1x16x16x4xbf16>, vector<1x16x16x4xbf16>, vector<1x16x16x4xbf16>, vector<1x16x16x4xbf16> -> vector<1x16x16x36xbf16>
    %11 = vector.shape_cast %10 : vector<1x16x16x36xbf16> to vector<256x36xbf16>
    %c0_3 = arith.constant 0 : index
    %c0_4 = arith.constant 0 : index
    %12 = vector.load %arg2[%c0_3, %c0_4] : memref<36x128xbf16, #tpu.memory_space<vmem>>, vector<36x128xbf16>
    %cst = arith.constant dense<0.000000e+00> : vector<256x128xf32>
    %13 = tpu.matmul %11, %12, %cst {dimension_numbers = #tpu.dot_dimension_numbers<[1], [0], [0], [1], [0, 0, 1, 1], [], []>} : vector<256x36xbf16>, vector<36x128xbf16>, vector<256x128xf32> -> vector<256x128xf32>
    %c0_5 = arith.constant 0 : index
    %c0_6 = arith.constant 0 : index
    %14 = vector.load %arg3[%c0_5, %c0_6] : memref<1x128xf32, #tpu.memory_space<vmem>>, vector<1x128xf32>
    %15 = vector.broadcast %14 : vector<1x128xf32> to vector<256x128xf32>
    %16 = arith.addf %13, %15 : vector<256x128xf32>
    %cst_7 = arith.constant 0.000000e+00 : f32
    %17 = vector.broadcast %cst_7 : f32 to vector<256x128xf32>
    %18 = arith.maximumf %16, %17 : vector<256x128xf32>
    %19 = vector.shape_cast %18 : vector<256x128xf32> to vector<1x256x128xf32>
    %cst_8 = arith.constant dense<0.000000e+00> : vector<1x128xf32>
    %20 = vector.multi_reduction <add>, %19, %cst_8 [1] : vector<1x256x128xf32> to vector<1x128xf32>
    %21 = arith.truncf %20 : vector<1x128xf32> to vector<1x128xbf16>
    %c0_9 = arith.constant 0 : index
    %c0_10 = arith.constant 0 : index
    %22 = vector.load %arg4[%c0_9, %c0_10] : memref<128x128xbf16, #tpu.memory_space<vmem>>, vector<128x128xbf16>
    %cst_11 = arith.constant dense<0.000000e+00> : vector<1x128xf32>
    %23 = tpu.matmul %21, %22, %cst_11 {dimension_numbers = #tpu.dot_dimension_numbers<[1], [0], [0], [1], [0, 0, 1, 1], [], []>} : vector<1x128xbf16>, vector<128x128xbf16>, vector<1x128xf32> -> vector<1x128xf32>
    %c0_12 = arith.constant 0 : index
    %c0_13 = arith.constant 0 : index
    %24 = vector.load %arg5[%c0_12, %c0_13] : memref<1x128xf32, #tpu.memory_space<vmem>>, vector<1x128xf32>
    %25 = arith.addf %23, %24 : vector<1x128xf32>
    %26 = vector.shape_cast %25 : vector<1x128xf32> to vector<1x1x128xf32>
    %27 = arith.truncf %26 : vector<1x1x128xf32> to vector<1x1x128xbf16>
    %c0_14 = arith.constant 0 : index
    %c0_15 = arith.constant 0 : index
    %c0_16 = arith.constant 0 : index
    %28 = vector.load %arg6[%c0_14, %c0_15, %c0_16] : memref<1x1x128xbf16, #tpu.memory_space<vmem>>, vector<1x1x128xbf16>
    tpu.vector_store %arg6[%c0_14, %c0_15, %c0_16], %27 {strides = array<i32>} : memref<1x1x128xbf16, #tpu.memory_space<vmem>>, vector<1x1x128xbf16>,
    return
  }
  func.func @transform_0(%arg0: i32) -> (i32, i32, i32, i32) {
    %c0_i32 = arith.constant 0 : i32
    %c0_i32_0 = arith.constant 0 : i32
    %c0_i32_1 = arith.constant 0 : i32
    %c0_i32_2 = arith.constant 0 : i32
    return %arg0, %c0_i32, %c0_i32_0, %c0_i32_1 : i32, i32, i32, i32
  }
  func.func @transform_1(%arg0: i32) -> (i32, i32) {
    %c0_i32 = arith.constant 0 : i32
    %c0_i32_0 = arith.constant 0 : i32
    %c0_i32_1 = arith.constant 0 : i32
    return %c0_i32, %c0_i32_0 : i32, i32
  }
  func.func @transform_2(%arg0: i32) -> (i32, i32) {
    %c0_i32 = arith.constant 0 : i32
    %c0_i32_0 = arith.constant 0 : i32
    %c0_i32_1 = arith.constant 0 : i32
    return %c0_i32, %c0_i32_0 : i32, i32
  }
  func.func @transform_3(%arg0: i32) -> (i32, i32) {
    %c0_i32 = arith.constant 0 : i32
    %c0_i32_0 = arith.constant 0 : i32
    %c0_i32_1 = arith.constant 0 : i32
    return %c0_i32, %c0_i32_0 : i32, i32
  }
  func.func @transform_4(%arg0: i32) -> (i32, i32) {
    %c0_i32 = arith.constant 0 : i32
    %c0_i32_0 = arith.constant 0 : i32
    %c0_i32_1 = arith.constant 0 : i32
    return %c0_i32, %c0_i32_0 : i32, i32
  }
  func.func @transform_5(%arg0: i32) -> (i32, i32, i32) {
    %c0_i32 = arith.constant 0 : i32
    %c0_i32_0 = arith.constant 0 : i32
    %c0_i32_1 = arith.constant 0 : i32
    return %arg0, %c0_i32, %c0_i32_0 : i32, i32, i32
  }
}

</mosaic_0001>

<llo_original>
// kernel: tpu_custom_call.1
$region0: #{tpu_custom_call.1}
  #allocation0 [shape = 'u32[]', space=smem, size = 0x4, offset = 0x4, fixed_abs, tag = 'smem constant byte address 0x4 - core index']
  #allocation1 [shape = 'u32[144,128]{1,0:T(1,128)}', space=vmem, size = 0x12000, scoped, tag = 'internal scratch']
  %s0 = inlined_call_operand.vmem [shape: bf16[2,18,18,4], index: 0, kind: input, shape index: {}]
  %s1 = inlined_call_operand.vmem [shape: bf16[36,128], index: 1, kind: input, shape index: {}]
  %s2 = inlined_call_operand.vmem [shape: f32[1,128], index: 2, kind: input, shape index: {}]
  %s3 = inlined_call_operand.vmem [shape: bf16[128,128], index: 3, kind: input, shape index: {}]
  %s4 = inlined_call_operand.vmem [shape: f32[1,128], index: 4, kind: input, shape index: {}]
  %s5 = inlined_call_operand.vmem [shape: bf16[2,1,128], index: 5, kind: output, shape index: {}]
  %s6 = sld [smem:[#allocation0]]
  $region53: #{tpu_custom_call.1} parent=0
    _
  %s8 = ssub.s32 1, %s6
  %s9 = scalar_select 0, %s8, %s6
  loop: start=0, step=1, limit=4
  $region2: #{tpu_custom_call.1} parent=0 // loop_pre_header
    _
  $region3: #{tpu_custom_call.1} parent=0 // loop_header
    %s11 = sphi 0, %s15
    %p12 = scmp.ge.s32.totalorder %s11, 4
    %s21 = sphi 0, %s23
    %s24 = sphi 0, %s21
    %s25 = sphi 0, %s24
    %s41 = sphi 0, %s25
    %s45 = sphi 0, %s45
    %s47 = sphi 0, %s45
    %s48 = sphi 0, %s47
    %s62 = sphi 0, %s48
    %s66 = sphi 0, %s66
    %s68 = sphi 0, %s66
    %s69 = sphi 0, %s68
    %s83 = sphi 0, %s69
    %s87 = sphi 0, %s87
    %s89 = sphi 0, %s87
    %s90 = sphi 0, %s89
    %s104 = sphi 0, %s90
    %s108 = sphi 0, %s108
    %s110 = sphi 0, %s108
    %s111 = sphi 0, %s110
    %s125 = sphi 0, %s111
    %s131 = sphi 0, %s133
    %s134 = sphi 0, %s131
    %s135 = sphi 0, %s134
    %s151 = sphi 0, %s135
  $region4: #{tpu_custom_call.1} parent=0 // loop_header_branch
    %14 = sbr.rel (%p12) target = $region8
  $region5: #{tpu_custom_call.1} parent=0 // loop_body
    %s16 = ssub.s32 %s11, 1
    %s17 = ssub.s32 %s11, 2
    %s18 = sadd.s32 %s11, 1
    %s19 = ssub.s32 %s11, %s18
    %p20 = scmp.eq.s32.totalorder %s19, 0
    %s22 = sadd.s32 %s21, 1
    %s23 = scalar_select %p20, %s21, %s22
    %p26 = pneg %p20
    %p27 = scmp.eq.s32.totalorder %s11, 1
    %p28 = por %p26, %p27
    %p29 = scmp.ne.s32.totalorder %s21, %s24
    %p30 = scmp.eq.s32.totalorder %s11, 0
    %p31 = por %p29, %p30
    %p32 = scmp.ne.s32.totalorder %s21, %s24
    %p33 = scmp.eq.s32.totalorder %s16, 1
    %p34 = por %p32, %p33
    %p35 = scmp.ne.s32.totalorder %s24, %s25
    %p36 = scmp.eq.s32.totalorder %s16, 0
    %p37 = por %p35, %p36
    %p38 = scmp.ne.s32.totalorder %s24, %s25
    %p39 = scmp.eq.s32.totalorder %s17, 1
    %p40 = por %p38, %p39
    %p42 = scmp.ne.s32.totalorder %s25, %s41
    %p43 = scmp.eq.s32.totalorder %s17, 0
    %p44 = por %p42, %p43
    %s46 = sadd.s32 %s45, 1
    %p49 = scmp.eq.s32.totalorder %s11, 1
    %p50 = scmp.ne.s32.totalorder %s45, %s47
    %p51 = scmp.eq.s32.totalorder %s11, 0
    %p52 = por %p50, %p51
    %p53 = scmp.ne.s32.totalorder %s45, %s47
    %p54 = scmp.eq.s32.totalorder %s16, 1
    %p55 = por %p53, %p54
    %p56 = scmp.ne.s32.totalorder %s47, %s48
    %p57 = scmp.eq.s32.totalorder %s16, 0
    %p58 = por %p56, %p57
    %p59 = scmp.ne.s32.totalorder %s47, %s48
    %p60 = scmp.eq.s32.totalorder %s17, 1
    %p61 = por %p59, %p60
    %p63 = scmp.ne.s32.totalorder %s48, %s62
    %p64 = scmp.eq.s32.totalorder %s17, 0
    %p65 = por %p63, %p64
    %s67 = sadd.s32 %s66, 1
    %p70 = scmp.eq.s32.totalorder %s11, 1
    %p71 = scmp.ne.s32.totalorder %s66, %s68
    %p72 = scmp.eq.s32.totalorder %s11, 0
    %p73 = por %p71, %p72
    %p74 = scmp.ne.s32.totalorder %s66, %s68
    %p75 = scmp.eq.s32.totalorder %s16, 1
    %p76 = por %p74, %p75
    %p77 = scmp.ne.s32.totalorder %s68, %s69
    %p78 = scmp.eq.s32.totalorder %s16, 0
    %p79 = por %p77, %p78
    %p80 = scmp.ne.s32.totalorder %s68, %s69
    %p81 = scmp.eq.s32.totalorder %s17, 1
    %p82 = por %p80, %p81
    %p84 = scmp.ne.s32.totalorder %s69, %s83
    %p85 = scmp.eq.s32.totalorder %s17, 0
    %p86 = por %p84, %p85
    %s88 = sadd.s32 %s87, 1
    %p91 = scmp.eq.s32.totalorder %s11, 1
    %p92 = scmp.ne.s32.totalorder %s87, %s89
    %p93 = scmp.eq.s32.totalorder %s11, 0
    %p94 = por %p92, %p93
    %p95 = scmp.ne.s32.totalorder %s87, %s89
    %p96 = scmp.eq.s32.totalorder %s16, 1
    %p97 = por %p95, %p96
    %p98 = scmp.ne.s32.totalorder %s89, %s90
    %p99 = scmp.eq.s32.totalorder %s16, 0
    %p100 = por %p98, %p99
    %p101 = scmp.ne.s32.totalorder %s89, %s90
    %p102 = scmp.eq.s32.totalorder %s17, 1
    %p103 = por %p101, %p102
    %p105 = scmp.ne.s32.totalorder %s90, %s104
    %p106 = scmp.eq.s32.totalorder %s17, 0
    %p107 = por %p105, %p106
    %s109 = sadd.s32 %s108, 1
    %p112 = scmp.eq.s32.totalorder %s11, 1
    %p113 = scmp.ne.s32.totalorder %s108, %s110
    %p114 = scmp.eq.s32.totalorder %s11, 0
    %p115 = por %p113, %p114
    %p116 = scmp.ne.s32.totalorder %s108, %s110
    %p117 = scmp.eq.s32.totalorder %s16, 1
    %p118 = por %p116, %p117
    %p119 = scmp.ne.s32.totalorder %s110, %s111
    %p120 = scmp.eq.s32.totalorder %s16, 0
    %p121 = por %p119, %p120
    %p122 = scmp.ne.s32.totalorder %s110, %s111
    %p123 = scmp.eq.s32.totalorder %s17, 1
    %p124 = por %p122, %p123
    %p126 = scmp.ne.s32.totalorder %s111, %s125
    %p127 = scmp.eq.s32.totalorder %s17, 0
    %p128 = por %p126, %p127
    %s129 = ssub.s32 %s11, %s18
    %p130 = scmp.eq.s32.totalorder %s129, 0
    %s132 = sadd.s32 %s131, 1
    %s133 = scalar_select %p130, %s131, %s132
    %p136 = pneg %p130
    %p137 = scmp.eq.s32.totalorder %s11, 1
    %p138 = por %p136, %p137
    %p139 = scmp.ne.s32.totalorder %s131, %s134
    %p140 = scmp.eq.s32.totalorder %s11, 0
    %p141 = por %p139, %p140
    %p142 = scmp.ne.s32.totalorder %s131, %s134
    %p143 = scmp.eq.s32.totalorder %s16, 1
    %p144 = por %p142, %p143
    %p145 = scmp.ne.s32.totalorder %s134, %s135
    %p146 = scmp.eq.s32.totalorder %s16, 0
    %p147 = por %p145, %p146
    %p148 = scmp.ne.s32.totalorder %s134, %s135
    %p149 = scmp.eq.s32.totalorder %s17, 1
    %p150 = por %p148, %p149
    %p152 = scmp.ne.s32.totalorder %s135, %s151
    %p153 = scmp.eq.s32.totalorder %s17, 0
    %p154 = por %p152, %p153
    %p155 = scmp.le.s32.totalorder 1, %s11
    %p156 = scmp.lt.s32.totalorder %s11, 3
    %p157 = pnand %p155, %p156
    %p158 = pneg %p157
    // Predicated region
    $region9: #{tpu_custom_call.1} parent=5 // pred_check
      _
    $region10: #{tpu_custom_call.1} parent=5 // pred_check_branch
      %160 = sbr.rel (%p157) target = $region12
    $region11: #{tpu_custom_call.1} parent=5 // pred_region
      %s161 = ssub.s32 %s11, 1
      // Predicated region
      $region13: #{tpu_custom_call.1} parent=11 // pred_check
        %p162 = pneg %p58
      $region14: #{tpu_custom_call.1} parent=11 // pred_check_branch
        %164 = sbr.rel (%p162) target = $region16
      $region15: #{tpu_custom_call.1} parent=11 // pred_region
        _
      $region16: #{tpu_custom_call.1} parent=11 // pred_fallthru
        _
      // Predicated region
      $region17: #{tpu_custom_call.1} parent=11 // pred_check
        %p165 = pneg %p79
      $region18: #{tpu_custom_call.1} parent=11 // pred_check_branch
        %167 = sbr.rel (%p165) target = $region20
      $region19: #{tpu_custom_call.1} parent=11 // pred_region
        _
      $region20: #{tpu_custom_call.1} parent=11 // pred_fallthru
        _
      // Predicated region
      $region21: #{tpu_custom_call.1} parent=11 // pred_check
        %p168 = pneg %p100
      $region22: #{tpu_custom_call.1} parent=11 // pred_check_branch
        %170 = sbr.rel (%p168) target = $region24
      $region23: #{tpu_custom_call.1} parent=11 // pred_region
        _
      $region24: #{tpu_custom_call.1} parent=11 // pred_fallthru
        _
      // Predicated region
      $region25: #{tpu_custom_call.1} parent=11 // pred_check
        %p171 = pneg %p121
      $region26: #{tpu_custom_call.1} parent=11 // pred_check_branch
        %173 = sbr.rel (%p171) target = $region28
      $region27: #{tpu_custom_call.1} parent=11 // pred_region
        _
      $region28: #{tpu_custom_call.1} parent=11 // pred_fallthru
        _
    $region12: #{tpu_custom_call.1} parent=5 // pred_fallthru
      _
    %p174 = scmp.lt.s32.totalorder %s11, 2
    // Predicated region
    $region29: #{tpu_custom_call.1} parent=5 // pred_check
      %p175 = pneg %p174
    $region30: #{tpu_custom_call.1} parent=5 // pred_check_branch
      %177 = sbr.rel (%p175) target = $region32
    $region31: #{tpu_custom_call.1} parent=5 // pred_region
      // Predicated region
      $region33: #{tpu_custom_call.1} parent=31 // pred_check
        %p178 = pneg %p31
      $region34: #{tpu_custom_call.1} parent=31 // pred_check_branch
        %180 = sbr.rel (%p178) target = $region36
      $region35: #{tpu_custom_call.1} parent=31 // pred_region
        %p181 = scmp.lt.s32.totalorder %s11, 1
        %s182 = scalar_select %p181, %s11, 1
        %s183 = smul.addr %s182, 54
        %s184 = smul.addr %s183, 4
        %s185 = scalar_lea.vmem %s0, %s184
      $region36: #{tpu_custom_call.1} parent=31 // pred_fallthru
        _
    $region32: #{tpu_custom_call.1} parent=5 // pred_fallthru
      _
    %p186 = scmp.le.s32.totalorder 1, %s11
    %p187 = scmp.lt.s32.totalorder %s11, 3
    %p188 = pnand %p186, %p187
    %p189 = pneg %p188
    // Predicated region
    $region37: #{tpu_custom_call.1} parent=5 // pred_check
      _
    $region38: #{tpu_custom_call.1} parent=5 // pred_check_branch
      %191 = sbr.rel (%p188) target = $region40
    $region39: #{tpu_custom_call.1} parent=5 // pred_region
      %s192 = ssub.s32 %s11, 1
      %p193 = scmp.lt.s32.totalorder %s16, 1
      %s194 = scalar_select %p193, %s16, 1
      %s195 = smul.addr %s194, 54
      %s196 = smul.addr %s195, 4
      %s197 = scalar_lea.vmem %s0, %s196
      %p198 = pneg %p37
      %p199 = pneg %p34
      %p200 = pneg %p58
      %p201 = pneg %p55
      %p202 = pneg %p79
      %p203 = pneg %p76
      %p204 = pneg %p100
      %p205 = pneg %p97
      %p206 = pneg %p121
      %p207 = pneg %p118
      %p208 = pneg %p147
      %p209 = pneg %p144
      %p210 = scmp.lt.s32.totalorder %s16, 1
      %s211 = scalar_select %p210, %s16, 1
      %s212 = scalar_lea.vmem %s5, %s211
      %p213 = scmp.lt.s32.totalorder %s16, 1
      %s214 = scalar_select %p213, %s16, 1
      %s215 = smul.addr %s214, 54
      %s216 = smul.addr %s215, 4
      %s217 = scalar_lea.vmem %s0, %s216
      %p218 = scmp.lt.s32.totalorder %s16, 1
      %s219 = scalar_select %p218, %s16, 1
      %s220 = scalar_lea.vmem %s5, %s219
      %v222 = vld [vmem:[%s217] sm:$0xf]
      %v223 = vld [vmem:[%s217 + $0x4] sm:$0xf]
      %v224 = vld [vmem:[%s217 + $0x8] sm:$0x1]
      %v225 = vld [vmem:[%s217 + $0xc] sm:$0xf]
      %v226 = vld [vmem:[%s217 + $0x10] sm:$0xf]
      %v227 = vld [vmem:[%s217 + $0x14] sm:$0x1]
      %v228 = vld [vmem:[%s217 + $0x18] sm:$0xf]
      %v229 = vld [vmem:[%s217 + $0x1c] sm:$0xf]
      %v230 = vld [vmem:[%s217 + $0x20] sm:$0x1]
      %v231 = vld [vmem:[%s217 + $0x24] sm:$0xf]
      %v232 = vld [vmem:[%s217 + $0x28] sm:$0xf]
      %v233 = vld [vmem:[%s217 + $0x2c] sm:$0x1]
      %v234 = vld [vmem:[%s217 + $0x30] sm:$0xf]
      %v235 = vld [vmem:[%s217 + $0x34] sm:$0xf]
      %v236 = vld [vmem:[%s217 + $0x38] sm:$0x1]
      %v237 = vld [vmem:[%s217 + $0x3c] sm:$0xf]
      %v238 = vld [vmem:[%s217 + $0x40] sm:$0xf]
      %v239 = vld [vmem:[%s217 + $0x44] sm:$0x1]
      %v240 = vld [vmem:[%s217 + $0x48] sm:$0xf]
      %v241 = vld [vmem:[%s217 + $0x4c] sm:$0xf]
      %v242 = vld [vmem:[%s217 + $0x50] sm:$0x1]
      %v243 = vld [vmem:[%s217 + $0x54] sm:$0xf]
      %v244 = vld [vmem:[%s217 + $0x58] sm:$0xf]
      %v245 = vld [vmem:[%s217 + $0x5c] sm:$0x1]
      %v246 = vld [vmem:[%s217 + $0x60] sm:$0xf]
      %v247 = vld [vmem:[%s217 + $0x64] sm:$0xf]
      %v248 = vld [vmem:[%s217 + $0x68] sm:$0x1]
      %v249 = vld [vmem:[%s217 + $0x6c] sm:$0xf]
      %v250 = vld [vmem:[%s217 + $0x70] sm:$0xf]
      %v251 = vld [vmem:[%s217 + $0x74] sm:$0x1]
      %v252 = vld [vmem:[%s217 + $0x78] sm:$0xf]
      %v253 = vld [vmem:[%s217 + $0x7c] sm:$0xf]
      %v254 = vld [vmem:[%s217 + $0x80] sm:$0x1]
      %v255 = vld [vmem:[%s217 + $0x84] sm:$0xf]
      %v256 = vld [vmem:[%s217 + $0x88] sm:$0xf]
      %v257 = vld [vmem:[%s217 + $0x8c] sm:$0x1]
      %v258 = vld [vmem:[%s217 + $0x90] sm:$0xf]
      %v259 = vld [vmem:[%s217 + $0x94] sm:$0xf]
      %v260 = vld [vmem:[%s217 + $0x98] sm:$0x1]
      %v261 = vld [vmem:[%s217 + $0x9c] sm:$0xf]
      %v262 = vld [vmem:[%s217 + $0xa0] sm:$0xf]
      %v263 = vld [vmem:[%s217 + $0xa4] sm:$0x1]
      %v264 = vld [vmem:[%s217 + $0xa8] sm:$0xf]
      %v265 = vld [vmem:[%s217 + $0xac] sm:$0xf]
      %v266 = vld [vmem:[%s217 + $0xb0] sm:$0x1]
      %v267 = vld [vmem:[%s217 + $0xb4] sm:$0xf]
      %v268 = vld [vmem:[%s217 + $0xb8] sm:$0xf]
      %v269 = vld [vmem:[%s217 + $0xbc] sm:$0x1]
      %v270 = vld [vmem:[%s217 + $0xc0] sm:$0xf]
      %v271 = vld [vmem:[%s217 + $0xc4] sm:$0xf]
      %v272 = vld [vmem:[%s217 + $0xc8] sm:$0x1]
      %v273 = vld [vmem:[%s217 + $0xcc] sm:$0xf]
      %v274 = vld [vmem:[%s217 + $0xd0] sm:$0xf]
      %v275 = vld [vmem:[%s217 + $0xd4] sm:$0x1]
      %v308 = vunpack.c.l.b16 %v222
      %v309 = vunpack.c.l.b16 %v223
      %v310 = vunpack.c.l.b16 %v225
      %v311 = vunpack.c.l.b16 %v226
      %v312 = vunpack.c.l.b16 %v228
      %v313 = vunpack.c.l.b16 %v229
      %v314 = vunpack.c.l.b16 %v231
      %v315 = vunpack.c.l.b16 %v232
      %v316 = vunpack.c.l.b16 %v234
      %v317 = vunpack.c.l.b16 %v235
      %v318 = vunpack.c.l.b16 %v237
      %v319 = vunpack.c.l.b16 %v238
      %v320 = vunpack.c.l.b16 %v240
      %v321 = vunpack.c.l.b16 %v241
      %v322 = vunpack.c.l.b16 %v243
      %v323 = vunpack.c.l.b16 %v244
      %v324 = vunpack.c.l.b16 %v246
      %v325 = vunpack.c.l.b16 %v247
      %v326 = vunpack.c.l.b16 %v249
      %v327 = vunpack.c.l.b16 %v250
      %v328 = vunpack.c.l.b16 %v252
      %v329 = vunpack.c.l.b16 %v253
      %v330 = vunpack.c.l.b16 %v255
      %v331 = vunpack.c.l.b16 %v256
      %v332 = vunpack.c.l.b16 %v258
      %v333 = vunpack.c.l.b16 %v259
      %v334 = vunpack.c.l.b16 %v261
      %v335 = vunpack.c.l.b16 %v262
      %v336 = vunpack.c.l.b16 %v264
      %v337 = vunpack.c.l.b16 %v265
      %v338 = vunpack.c.l.b16 %v267
      %v339 = vunpack.c.l.b16 %v268
      %v340 = vpack.c.b16 %v309, %v308
      %v341 = vpack.c.b16 %v311, %v310
      %v342 = vpack.c.b16 %v313, %v312
      %v343 = vpack.c.b16 %v315, %v314
      %v344 = vpack.c.b16 %v317, %v316
      %v345 = vpack.c.b16 %v319, %v318
      %v346 = vpack.c.b16 %v321, %v320
      %v347 = vpack.c.b16 %v323, %v322
      %v348 = vpack.c.b16 %v325, %v324
      %v349 = vpack.c.b16 %v327, %v326
      %v350 = vpack.c.b16 %v329, %v328
      %v351 = vpack.c.b16 %v331, %v330
      %v352 = vpack.c.b16 %v333, %v332
      %v353 = vpack.c.b16 %v335, %v334
      %v354 = vpack.c.b16 %v337, %v336
      %v355 = vpack.c.b16 %v339, %v338
      %v372 = vunpack.c.l.b16 %v224
      %v373 = vunpack.c.l.b16 %v227
      %v374 = vunpack.c.l.b16 %v230
      %v375 = vunpack.c.l.b16 %v233
      %v376 = vunpack.c.l.b16 %v236
      %v377 = vunpack.c.l.b16 %v239
      %v378 = vunpack.c.l.b16 %v242
      %v379 = vunpack.c.l.b16 %v245
      %v380 = vunpack.c.l.b16 %v248
      %v381 = vunpack.c.l.b16 %v251
      %v382 = vunpack.c.l.b16 %v254
      %v383 = vunpack.c.l.b16 %v257
      %v384 = vunpack.c.l.b16 %v260
      %v385 = vunpack.c.l.b16 %v263
      %v386 = vunpack.c.l.b16 %v266
      %v387 = vunpack.c.l.b16 %v269
      %v388 = vpack.c.b16 %v372, %v372
      %v389 = vpack.c.b16 %v373, %v373
      %v390 = vpack.c.b16 %v374, %v374
      %v391 = vpack.c.b16 %v375, %v375
      %v392 = vpack.c.b16 %v376, %v376
      %v393 = vpack.c.b16 %v377, %v377
      %v394 = vpack.c.b16 %v378, %v378
      %v395 = vpack.c.b16 %v379, %v379
      %v396 = vpack.c.b16 %v380, %v380
      %v397 = vpack.c.b16 %v381, %v381
      %v398 = vpack.c.b16 %v382, %v382
      %v399 = vpack.c.b16 %v383, %v383
      %v400 = vpack.c.b16 %v384, %v384
      %v401 = vpack.c.b16 %v385, %v385
      %v402 = vpack.c.b16 %v386, %v386
      %v403 = vpack.c.b16 %v387, %v387
      %vm404 = vsmask.f32 7424
      %v406 = vshrl.u32 %v340, 16
      %v408 = vshll.u32 %v340, 16
      %v410 = vrot.slane %v408, 1
      %v411 = vor.u32 %v406, %v410
      %v413 = vshll.u32 %v388, 16
      %v415 = vrot.slane %v413, 1
      %v416 = vsel %vm404, %v411, %v415
      %v418 = vshrl.u32 %v341, 16
      %v420 = vshll.u32 %v341, 16
      %v422 = vrot.slane %v420, 1
      %v423 = vor.u32 %v418, %v422
      %v425 = vshll.u32 %v389, 16
      %v427 = vrot.slane %v425, 1
      %v428 = vsel %vm404, %v423, %v427
      %v430 = vshrl.u32 %v342, 16
      %v432 = vshll.u32 %v342, 16
      %v434 = vrot.slane %v432, 1
      %v435 = vor.u32 %v430, %v434
      %v437 = vshll.u32 %v390, 16
      %v439 = vrot.slane %v437, 1
      %v440 = vsel %vm404, %v435, %v439
      %v442 = vshrl.u32 %v343, 16
      %v444 = vshll.u32 %v343, 16
      %v446 = vrot.slane %v444, 1
      %v447 = vor.u32 %v442, %v446
      %v449 = vshll.u32 %v391, 16
      %v451 = vrot.slane %v449, 1
      %v452 = vsel %vm404, %v447, %v451
      %v454 = vshrl.u32 %v344, 16
      %v456 = vshll.u32 %v344, 16
      %v458 = vrot.slane %v456, 1
      %v459 = vor.u32 %v454, %v458
      %v461 = vshll.u32 %v392, 16
      %v463 = vrot.slane %v461, 1
      %v464 = vsel %vm404, %v459, %v463
      %v466 = vshrl.u32 %v345, 16
      %v468 = vshll.u32 %v345, 16
      %v470 = vrot.slane %v468, 1
      %v471 = vor.u32 %v466, %v470
      %v473 = vshll.u32 %v393, 16
      %v475 = vrot.slane %v473, 1
      %v476 = vsel %vm404, %v471, %v475
      %v478 = vshrl.u32 %v346, 16
      %v480 = vshll.u32 %v346, 16
      %v482 = vrot.slane %v480, 1
      %v483 = vor.u32 %v478, %v482
      %v485 = vshll.u32 %v394, 16
      %v487 = vrot.slane %v485, 1
      %v488 = vsel %vm404, %v483, %v487
      %v490 = vshrl.u32 %v347, 16
      %v492 = vshll.u32 %v347, 16
      %v494 = vrot.slane %v492, 1
      %v495 = vor.u32 %v490, %v494
      %v497 = vshll.u32 %v395, 16
      %v499 = vrot.slane %v497, 1
      %v500 = vsel %vm404, %v495, %v499
      %v502 = vshrl.u32 %v348, 16
      %v504 = vshll.u32 %v348, 16
      %v506 = vrot.slane %v504, 1
      %v507 = vor.u32 %v502, %v506
      %v509 = vshll.u32 %v396, 16
      %v511 = vrot.slane %v509, 1
      %v512 = vsel %vm404, %v507, %v511
      %v514 = vshrl.u32 %v349, 16
      %v516 = vshll.u32 %v349, 16
      %v518 = vrot.slane %v516, 1
      %v519 = vor.u32 %v514, %v518
      %v521 = vshll.u32 %v397, 16
      %v523 = vrot.slane %v521, 1
      %v524 = vsel %vm404, %v519, %v523
      %v526 = vshrl.u32 %v350, 16
      %v528 = vshll.u32 %v350, 16
      %v530 = vrot.slane %v528, 1
      %v531 = vor.u32 %v526, %v530
      %v533 = vshll.u32 %v398, 16
      %v535 = vrot.slane %v533, 1
      %v536 = vsel %vm404, %v531, %v535
      %v538 = vshrl.u32 %v351, 16
      %v540 = vshll.u32 %v351, 16
      %v542 = vrot.slane %v540, 1
      %v543 = vor.u32 %v538, %v542
      %v545 = vshll.u32 %v399, 16
      %v547 = vrot.slane %v545, 1
      %v548 = vsel %vm404, %v543, %v547
      %v550 = vshrl.u32 %v352, 16
      %v552 = vshll.u32 %v352, 16
      %v554 = vrot.slane %v552, 1
      %v555 = vor.u32 %v550, %v554
      %v557 = vshll.u32 %v400, 16
      %v559 = vrot.slane %v557, 1
      %v560 = vsel %vm404, %v555, %v559
      %v562 = vshrl.u32 %v353, 16
      %v564 = vshll.u32 %v353, 16
      %v566 = vrot.slane %v564, 1
      %v567 = vor.u32 %v562, %v566
      %v569 = vshll.u32 %v401, 16
      %v571 = vrot.slane %v569, 1
      %v572 = vsel %vm404, %v567, %v571
      %v574 = vshrl.u32 %v354, 16
      %v576 = vshll.u32 %v354, 16
      %v578 = vrot.slane %v576, 1
      %v579 = vor.u32 %v574, %v578
      %v581 = vshll.u32 %v402, 16
      %v583 = vrot.slane %v581, 1
      %v584 = vsel %vm404, %v579, %v583
      %v586 = vshrl.u32 %v355, 16
      %v588 = vshll.u32 %v355, 16
      %v590 = vrot.slane %v588, 1
      %v591 = vor.u32 %v586, %v590
      %v593 = vshll.u32 %v403, 16
      %v595 = vrot.slane %v593, 1
      %v596 = vsel %vm404, %v591, %v595
      %597 = vrot.lane.b32.xlu0 %v416, 4
      %v598 = vpop.permute.xlu0 %597
      %599 = vrot.lane.b32.xlu0 %v428, 4
      %v600 = vpop.permute.xlu0 %599
      %601 = vrot.lane.b32.xlu0 %v440, 4
      %v602 = vpop.permute.xlu0 %601
      %603 = vrot.lane.b32.xlu0 %v452, 4
      %v604 = vpop.permute.xlu0 %603
      %605 = vrot.lane.b32.xlu0 %v464, 4
      %v606 = vpop.permute.xlu0 %605
      %607 = vrot.lane.b32.xlu0 %v476, 4
      %v608 = vpop.permute.xlu0 %607
      %609 = vrot.lane.b32.xlu0 %v488, 4
      %v610 = vpop.permute.xlu0 %609
      %611 = vrot.lane.b32.xlu0 %v500, 4
      %v612 = vpop.permute.xlu0 %611
      %613 = vrot.lane.b32.xlu0 %v512, 4
      %v614 = vpop.permute.xlu0 %613
      %615 = vrot.lane.b32.xlu0 %v524, 4
      %v616 = vpop.permute.xlu0 %615
      %617 = vrot.lane.b32.xlu0 %v536, 4
      %v618 = vpop.permute.xlu0 %617
      %619 = vrot.lane.b32.xlu0 %v548, 4
      %v620 = vpop.permute.xlu0 %619
      %621 = vrot.lane.b32.xlu0 %v560, 4
      %v622 = vpop.permute.xlu0 %621
      %623 = vrot.lane.b32.xlu0 %v572, 4
      %v624 = vpop.permute.xlu0 %623
      %625 = vrot.lane.b32.xlu0 %v584, 4
      %v626 = vpop.permute.xlu0 %625
      %627 = vrot.lane.b32.xlu0 %v596, 4
      %v628 = vpop.permute.xlu0 %627
      %vm629 = vcmask 1046528
      %v630 = vrot.slane %v340, 1
      %v631 = vrot.slane %v388, 1
      %v632 = vsel %vm629, %v630, %v631
      %v633 = vrot.slane %v341, 1
      %v634 = vrot.slane %v389, 1
      %v635 = vsel %vm629, %v633, %v634
      %v636 = vrot.slane %v342, 1
      %v637 = vrot.slane %v390, 1
      %v638 = vsel %vm629, %v636, %v637
      %v639 = vrot.slane %v343, 1
      %v640 = vrot.slane %v391, 1
      %v641 = vsel %vm629, %v639, %v640
      %v642 = vrot.slane %v344, 1
      %v643 = vrot.slane %v392, 1
      %v644 = vsel %vm629, %v642, %v643
      %v645 = vrot.slane %v345, 1
      %v646 = vrot.slane %v393, 1
      %v647 = vsel %vm629, %v645, %v646
      %v648 = vrot.slane %v346, 1
      %v649 = vrot.slane %v394, 1
      %v650 = vsel %vm629, %v648, %v649
      %v651 = vrot.slane %v347, 1
      %v652 = vrot.slane %v395, 1
      %v653 = vsel %vm629, %v651, %v652
      %v654 = vrot.slane %v348, 1
      %v655 = vrot.slane %v396, 1
      %v656 = vsel %vm629, %v654, %v655
      %v657 = vrot.slane %v349, 1
      %v658 = vrot.slane %v397, 1
      %v659 = vsel %vm629, %v657, %v658
      %v660 = vrot.slane %v350, 1
      %v661 = vrot.slane %v398, 1
      %v662 = vsel %vm629, %v660, %v661
      %v663 = vrot.slane %v351, 1
      %v664 = vrot.slane %v399, 1
      %v665 = vsel %vm629, %v663, %v664
      %v666 = vrot.slane %v352, 1
      %v667 = vrot.slane %v400, 1
      %v668 = vsel %vm629, %v666, %v667
      %v669 = vrot.slane %v353, 1
      %v670 = vrot.slane %v401, 1
      %v671 = vsel %vm629, %v669, %v670
      %v672 = vrot.slane %v354, 1
      %v673 = vrot.slane %v402, 1
      %v674 = vsel %vm629, %v672, %v673
      %v675 = vrot.slane %v355, 1
      %v676 = vrot.slane %v403, 1
      %v677 = vsel %vm629, %v675, %v676
      %678 = vrot.lane.b32.xlu0 %v632, 8
      %v679 = vpop.permute.xlu0 %678
      %680 = vrot.lane.b32.xlu0 %v635, 8
      %v681 = vpop.permute.xlu0 %680
      %682 = vrot.lane.b32.xlu0 %v638, 8
      %v683 = vpop.permute.xlu0 %682
      %684 = vrot.lane.b32.xlu0 %v641, 8
      %v685 = vpop.permute.xlu0 %684
      %686 = vrot.lane.b32.xlu0 %v644, 8
      %v687 = vpop.permute.xlu0 %686
      %688 = vrot.lane.b32.xlu0 %v647, 8
      %v689 = vpop.permute.xlu0 %688
      %690 = vrot.lane.b32.xlu0 %v650, 8
      %v691 = vpop.permute.xlu0 %690
      %692 = vrot.lane.b32.xlu0 %v653, 8
      %v693 = vpop.permute.xlu0 %692
      %694 = vrot.lane.b32.xlu0 %v656, 8
      %v695 = vpop.permute.xlu0 %694
      %696 = vrot.lane.b32.xlu0 %v659, 8
      %v697 = vpop.permute.xlu0 %696
      %698 = vrot.lane.b32.xlu0 %v662, 8
      %v699 = vpop.permute.xlu0 %698
      %700 = vrot.lane.b32.xlu0 %v665, 8
      %v701 = vpop.permute.xlu0 %700
      %702 = vrot.lane.b32.xlu0 %v668, 8
      %v703 = vpop.permute.xlu0 %702
      %704 = vrot.lane.b32.xlu0 %v671, 8
      %v705 = vpop.permute.xlu0 %704
      %706 = vrot.lane.b32.xlu0 %v674, 8
      %v707 = vpop.permute.xlu0 %706
      %708 = vrot.lane.b32.xlu0 %v677, 8
      %v709 = vpop.permute.xlu0 %708
      %v712 = vunpack.c.l.b16 %v270
      %v713 = vunpack.c.l.b16 %v271
      %v714 = vpack.c.b16 %v713, %v712
      %715 = vrot.lane.b32.xlu0 %v341, 12
      %v716 = vpop.permute.xlu0 %715
      %717 = vrot.lane.b32.xlu0 %v342, 12
      %v718 = vpop.permute.xlu0 %717
      %719 = vrot.lane.b32.xlu0 %v343, 12
      %v720 = vpop.permute.xlu0 %719
      %721 = vrot.lane.b32.xlu0 %v344, 12
      %v722 = vpop.permute.xlu0 %721
      %723 = vrot.lane.b32.xlu0 %v345, 12
      %v724 = vpop.permute.xlu0 %723
      %725 = vrot.lane.b32.xlu0 %v346, 12
      %v726 = vpop.permute.xlu0 %725
      %727 = vrot.lane.b32.xlu0 %v347, 12
      %v728 = vpop.permute.xlu0 %727
      %729 = vrot.lane.b32.xlu0 %v348, 12
      %v730 = vpop.permute.xlu0 %729
      %731 = vrot.lane.b32.xlu0 %v349, 12
      %v732 = vpop.permute.xlu0 %731
      %733 = vrot.lane.b32.xlu0 %v350, 12
      %v734 = vpop.permute.xlu0 %733
      %735 = vrot.lane.b32.xlu0 %v351, 12
      %v736 = vpop.permute.xlu0 %735
      %737 = vrot.lane.b32.xlu0 %v352, 12
      %v738 = vpop.permute.xlu0 %737
      %739 = vrot.lane.b32.xlu0 %v353, 12
      %v740 = vpop.permute.xlu0 %739
      %741 = vrot.lane.b32.xlu0 %v354, 12
      %v742 = vpop.permute.xlu0 %741
      %743 = vrot.lane.b32.xlu0 %v355, 12
      %v744 = vpop.permute.xlu0 %743
      %745 = vrot.lane.b32.xlu0 %v714, 12
      %v746 = vpop.permute.xlu0 %745
      %v748 = vunpack.c.l.b16 %v272
      %v749 = vpack.c.b16 %v748, %v748
      %v751 = vshrl.u32 %v714, 16
      %v753 = vshll.u32 %v714, 16
      %v755 = vrot.slane %v753, 1
      %v756 = vor.u32 %v751, %v755
      %v758 = vshll.u32 %v749, 16
      %v760 = vrot.slane %v758, 1
      %v761 = vsel %vm404, %v756, %v760
      %762 = vrot.lane.b32.xlu0 %v428, 16
      %v763 = vpop.permute.xlu0 %762
      %764 = vrot.lane.b32.xlu0 %v440, 16
      %v765 = vpop.permute.xlu0 %764
      %766 = vrot.lane.b32.xlu0 %v452, 16
      %v767 = vpop.permute.xlu0 %766
      %768 = vrot.lane.b32.xlu0 %v464, 16
      %v769 = vpop.permute.xlu0 %768
      %770 = vrot.lane.b32.xlu0 %v476, 16
      %v771 = vpop.permute.xlu0 %770
      %772 = vrot.lane.b32.xlu0 %v488, 16
      %v773 = vpop.permute.xlu0 %772
      %774 = vrot.lane.b32.xlu0 %v500, 16
      %v775 = vpop.permute.xlu0 %774
      %776 = vrot.lane.b32.xlu0 %v512, 16
      %v777 = vpop.permute.xlu0 %776
      %778 = vrot.lane.b32.xlu0 %v524, 16
      %v779 = vpop.permute.xlu0 %778
      %780 = vrot.lane.b32.xlu0 %v536, 16
      %v781 = vpop.permute.xlu0 %780
      %782 = vrot.lane.b32.xlu0 %v548, 16
      %v783 = vpop.permute.xlu0 %782
      %784 = vrot.lane.b32.xlu0 %v560, 16
      %v785 = vpop.permute.xlu0 %784
      %786 = vrot.lane.b32.xlu0 %v572, 16
      %v787 = vpop.permute.xlu0 %786
      %788 = vrot.lane.b32.xlu0 %v584, 16
      %v789 = vpop.permute.xlu0 %788
      %790 = vrot.lane.b32.xlu0 %v596, 16
      %v791 = vpop.permute.xlu0 %790
      %792 = vrot.lane.b32.xlu0 %v761, 16
      %v793 = vpop.permute.xlu0 %792
      %v794 = vrot.slane %v714, 1
      %v795 = vrot.slane %v749, 1
      %v796 = vsel %vm629, %v794, %v795
      %797 = vrot.lane.b32.xlu0 %v635, 20
      %v798 = vpop.permute.xlu0 %797
      %799 = vrot.lane.b32.xlu0 %v638, 20
      %v800 = vpop.permute.xlu0 %799
      %801 = vrot.lane.b32.xlu0 %v641, 20
      %v802 = vpop.permute.xlu0 %801
      %803 = vrot.lane.b32.xlu0 %v644, 20
      %v804 = vpop.permute.xlu0 %803
      %805 = vrot.lane.b32.xlu0 %v647, 20
      %v806 = vpop.permute.xlu0 %805
      %807 = vrot.lane.b32.xlu0 %v650, 20
      %v808 = vpop.permute.xlu0 %807
      %809 = vrot.lane.b32.xlu0 %v653, 20
      %v810 = vpop.permute.xlu0 %809
      %811 = vrot.lane.b32.xlu0 %v656, 20
      %v812 = vpop.permute.xlu0 %811
      %813 = vrot.lane.b32.xlu0 %v659, 20
      %v814 = vpop.permute.xlu0 %813
      %815 = vrot.lane.b32.xlu0 %v662, 20
      %v816 = vpop.permute.xlu0 %815
      %817 = vrot.lane.b32.xlu0 %v665, 20
      %v818 = vpop.permute.xlu0 %817
      %819 = vrot.lane.b32.xlu0 %v668, 20
      %v820 = vpop.permute.xlu0 %819
      %821 = vrot.lane.b32.xlu0 %v671, 20
      %v822 = vpop.permute.xlu0 %821
      %823 = vrot.lane.b32.xlu0 %v674, 20
      %v824 = vpop.permute.xlu0 %823
      %825 = vrot.lane.b32.xlu0 %v677, 20
      %v826 = vpop.permute.xlu0 %825
      %827 = vrot.lane.b32.xlu0 %v796, 20
      %v828 = vpop.permute.xlu0 %827
      %v831 = vunpack.c.l.b16 %v273
      %v832 = vunpack.c.l.b16 %v274
      %v833 = vpack.c.b16 %v832, %v831
      %834 = vrot.lane.b32.xlu0 %v342, 24
      %v835 = vpop.permute.xlu0 %834
      %836 = vrot.lane.b32.xlu0 %v343, 24
      %v837 = vpop.permute.xlu0 %836
      %838 = vrot.lane.b32.xlu0 %v344, 24
      %v839 = vpop.permute.xlu0 %838
      %840 = vrot.lane.b32.xlu0 %v345, 24
      %v841 = vpop.permute.xlu0 %840
      %842 = vrot.lane.b32.xlu0 %v346, 24
      %v843 = vpop.permute.xlu0 %842
      %844 = vrot.lane.b32.xlu0 %v347, 24
      %v845 = vpop.permute.xlu0 %844
      %846 = vrot.lane.b32.xlu0 %v348, 24
      %v847 = vpop.permute.xlu0 %846
      %848 = vrot.lane.b32.xlu0 %v349, 24
      %v849 = vpop.permute.xlu0 %848
      %850 = vrot.lane.b32.xlu0 %v350, 24
      %v851 = vpop.permute.xlu0 %850
      %852 = vrot.lane.b32.xlu0 %v351, 24
      %v853 = vpop.permute.xlu0 %852
      %854 = vrot.lane.b32.xlu0 %v352, 24
      %v855 = vpop.permute.xlu0 %854
      %856 = vrot.lane.b32.xlu0 %v353, 24
      %v857 = vpop.permute.xlu0 %856
      %858 = vrot.lane.b32.xlu0 %v354, 24
      %v859 = vpop.permute.xlu0 %858
      %860 = vrot.lane.b32.xlu0 %v355, 24
      %v861 = vpop.permute.xlu0 %860
      %862 = vrot.lane.b32.xlu0 %v714, 24
      %v863 = vpop.permute.xlu0 %862
      %864 = vrot.lane.b32.xlu0 %v833, 24
      %v865 = vpop.permute.xlu0 %864
      %v867 = vunpack.c.l.b16 %v275
      %v868 = vpack.c.b16 %v867, %v867
      %v870 = vshrl.u32 %v833, 16
      %v872 = vshll.u32 %v833, 16
      %v874 = vrot.slane %v872, 1
      %v875 = vor.u32 %v870, %v874
      %v877 = vshll.u32 %v868, 16
      %v879 = vrot.slane %v877, 1
      %v880 = vsel %vm404, %v875, %v879
      %881 = vrot.lane.b32.xlu0 %v440, 28
      %v882 = vpop.permute.xlu0 %881
      %883 = vrot.lane.b32.xlu0 %v452, 28
      %v884 = vpop.permute.xlu0 %883
      %885 = vrot.lane.b32.xlu0 %v464, 28
      %v886 = vpop.permute.xlu0 %885
      %887 = vrot.lane.b32.xlu0 %v476, 28
      %v888 = vpop.permute.xlu0 %887
      %889 = vrot.lane.b32.xlu0 %v488, 28
      %v890 = vpop.permute.xlu0 %889
      %891 = vrot.lane.b32.xlu0 %v500, 28
      %v892 = vpop.permute.xlu0 %891
      %893 = vrot.lane.b32.xlu0 %v512, 28
      %v894 = vpop.permute.xlu0 %893
      %895 = vrot.lane.b32.xlu0 %v524, 28
      %v896 = vpop.permute.xlu0 %895
      %897 = vrot.lane.b32.xlu0 %v536, 28
      %v898 = vpop.permute.xlu0 %897
      %899 = vrot.lane.b32.xlu0 %v548, 28
      %v900 = vpop.permute.xlu0 %899
      %901 = vrot.lane.b32.xlu0 %v560, 28
      %v902 = vpop.permute.xlu0 %901
      %903 = vrot.lane.b32.xlu0 %v572, 28
      %v904 = vpop.permute.xlu0 %903
      %905 = vrot.lane.b32.xlu0 %v584, 28
      %v906 = vpop.permute.xlu0 %905
      %907 = vrot.lane.b32.xlu0 %v596, 28
      %v908 = vpop.permute.xlu0 %907
      %909 = vrot.lane.b32.xlu0 %v761, 28
      %v910 = vpop.permute.xlu0 %909
      %911 = vrot.lane.b32.xlu0 %v880, 28
      %v912 = vpop.permute.xlu0 %911
      %v913 = vrot.slane %v833, 1
      %v914 = vrot.slane %v868, 1
      %v915 = vsel %vm629, %v913, %v914
      %916 = vrot.lane.b32.xlu0 %v638, 32
      %v917 = vpop.permute.xlu0 %916
      %918 = vrot.lane.b32.xlu0 %v641, 32
      %v919 = vpop.permute.xlu0 %918
      %920 = vrot.lane.b32.xlu0 %v644, 32
      %v921 = vpop.permute.xlu0 %920
      %922 = vrot.lane.b32.xlu0 %v647, 32
      %v923 = vpop.permute.xlu0 %922
      %924 = vrot.lane.b32.xlu0 %v650, 32
      %v925 = vpop.permute.xlu0 %924
      %926 = vrot.lane.b32.xlu0 %v653, 32
      %v927 = vpop.permute.xlu0 %926
      %928 = vrot.lane.b32.xlu0 %v656, 32
      %v929 = vpop.permute.xlu0 %928
      %930 = vrot.lane.b32.xlu0 %v659, 32
      %v931 = vpop.permute.xlu0 %930
      %932 = vrot.lane.b32.xlu0 %v662, 32
      %v933 = vpop.permute.xlu0 %932
      %934 = vrot.lane.b32.xlu0 %v665, 32
      %v935 = vpop.permute.xlu0 %934
      %936 = vrot.lane.b32.xlu0 %v668, 32
      %v937 = vpop.permute.xlu0 %936
      %938 = vrot.lane.b32.xlu0 %v671, 32
      %v939 = vpop.permute.xlu0 %938
      %940 = vrot.lane.b32.xlu0 %v674, 32
      %v941 = vpop.permute.xlu0 %940
      %942 = vrot.lane.b32.xlu0 %v677, 32
      %v943 = vpop.permute.xlu0 %942
      %944 = vrot.lane.b32.xlu0 %v796, 32
      %v945 = vpop.permute.xlu0 %944
      %946 = vrot.lane.b32.xlu0 %v915, 32
      %v947 = vpop.permute.xlu0 %946
      %vm948 = vcmask 31744
      %v950 = vsel %vm948, %v340, %v598
      %v952 = vsel %vm948, %v341, %v600
      %v954 = vsel %vm948, %v342, %v602
      %v956 = vsel %vm948, %v343, %v604
      %v958 = vsel %vm948, %v344, %v606
      %v960 = vsel %vm948, %v345, %v608
      %v962 = vsel %vm948, %v346, %v610
      %v964 = vsel %vm948, %v347, %v612
      %v966 = vsel %vm948, %v348, %v614
      %v968 = vsel %vm948, %v349, %v616
      %v970 = vsel %vm948, %v350, %v618
      %v972 = vsel %vm948, %v351, %v620
      %v974 = vsel %vm948, %v352, %v622
      %v976 = vsel %vm948, %v353, %v624
      %v978 = vsel %vm948, %v354, %v626
      %v980 = vsel %vm948, %v355, %v628
      %vm981 = vcmask 64512
      %v983 = vsel %vm981, %v950, %v679
      %v985 = vsel %vm981, %v952, %v681
      %v987 = vsel %vm981, %v954, %v683
      %v989 = vsel %vm981, %v956, %v685
      %v991 = vsel %vm981, %v958, %v687
      %v993 = vsel %vm981, %v960, %v689
      %v995 = vsel %vm981, %v962, %v691
      %v997 = vsel %vm981, %v964, %v693
      %v999 = vsel %vm981, %v966, %v695
      %v1001 = vsel %vm981, %v968, %v697
      %v1003 = vsel %vm981, %v970, %v699
      %v1005 = vsel %vm981, %v972, %v701
      %v1007 = vsel %vm981, %v974, %v703
      %v1009 = vsel %vm981, %v976, %v705
      %v1011 = vsel %vm981, %v978, %v707
      %v1013 = vsel %vm981, %v980, %v709
      %vm1014 = vcmask 97280
      %v1016 = vsel %vm1014, %v983, %v716
      %v1018 = vsel %vm1014, %v985, %v718
      %v1020 = vsel %vm1014, %v987, %v720
      %v1022 = vsel %vm1014, %v989, %v722
      %v1024 = vsel %vm1014, %v991, %v724
      %v1026 = vsel %vm1014, %v993, %v726
      %v1028 = vsel %vm1014, %v995, %v728
      %v1030 = vsel %vm1014, %v997, %v730
      %v1032 = vsel %vm1014, %v999, %v732
      %v1034 = vsel %vm1014, %v1001, %v734
      %v1036 = vsel %vm1014, %v1003, %v736
      %v1038 = vsel %vm1014, %v1005, %v738
      %v1040 = vsel %vm1014, %v1007, %v740
      %v1042 = vsel %vm1014, %v1009, %v742
      %v1044 = vsel %vm1014, %v1011, %v744
      %v1046 = vsel %vm1014, %v1013, %v746
      %vm1047 = vcmask 130048
      %v1049 = vsel %vm1047, %v1016, %v763
      %v1051 = vsel %vm1047, %v1018, %v765
      %v1053 = vsel %vm1047, %v1020, %v767
      %v1055 = vsel %vm1047, %v1022, %v769
      %v1057 = vsel %vm1047, %v1024, %v771
      %v1059 = vsel %vm1047, %v1026, %v773
      %v1061 = vsel %vm1047, %v1028, %v775
      %v1063 = vsel %vm1047, %v1030, %v777
      %v1065 = vsel %vm1047, %v1032, %v779
      %v1067 = vsel %vm1047, %v1034, %v781
      %v1069 = vsel %vm1047, %v1036, %v783
      %v1071 = vsel %vm1047, %v1038, %v785
      %v1073 = vsel %vm1047, %v1040, %v787
      %v1075 = vsel %vm1047, %v1042, %v789
      %v1077 = vsel %vm1047, %v1044, %v791
      %v1079 = vsel %vm1047, %v1046, %v793
      %vm1080 = vcmask 162816
      %v1082 = vsel %vm1080, %v1049, %v798
      %v1084 = vsel %vm1080, %v1051, %v800
      %v1086 = vsel %vm1080, %v1053, %v802
      %v1088 = vsel %vm1080, %v1055, %v804
      %v1090 = vsel %vm1080, %v1057, %v806
      %v1092 = vsel %vm1080, %v1059, %v808
      %v1094 = vsel %vm1080, %v1061, %v810
      %v1096 = vsel %vm1080, %v1063, %v812
      %v1098 = vsel %vm1080, %v1065, %v814
      %v1100 = vsel %vm1080, %v1067, %v816
      %v1102 = vsel %vm1080, %v1069, %v818
      %v1104 = vsel %vm1080, %v1071, %v820
      %v1106 = vsel %vm1080, %v1073, %v822
      %v1108 = vsel %vm1080, %v1075, %v824
      %v1110 = vsel %vm1080, %v1077, %v826
      %v1112 = vsel %vm1080, %v1079, %v828
      %vm1113 = vcmask 195584
      %v1115 = vsel %vm1113, %v1082, %v835
      %v1117 = vsel %vm1113, %v1084, %v837
      %v1119 = vsel %vm1113, %v1086, %v839
      %v1121 = vsel %vm1113, %v1088, %v841
      %v1123 = vsel %vm1113, %v1090, %v843
      %v1125 = vsel %vm1113, %v1092, %v845
      %v1127 = vsel %vm1113, %v1094, %v847
      %v1129 = vsel %vm1113, %v1096, %v849
      %v1131 = vsel %vm1113, %v1098, %v851
      %v1133 = vsel %vm1113, %v1100, %v853
      %v1135 = vsel %vm1113, %v1102, %v855
      %v1137 = vsel %vm1113, %v1104, %v857
      %v1139 = vsel %vm1113, %v1106, %v859
      %v1141 = vsel %vm1113, %v1108, %v861
      %v1143 = vsel %vm1113, %v1110, %v863
      %v1145 = vsel %vm1113, %v1112, %v865
      %vm1146 = vcmask 228352
      %v1148 = vsel %vm1146, %v1115, %v882
      %v1150 = vsel %vm1146, %v1117, %v884
      %v1152 = vsel %vm1146, %v1119, %v886
      %v1154 = vsel %vm1146, %v1121, %v888
      %v1156 = vsel %vm1146, %v1123, %v890
      %v1158 = vsel %vm1146, %v1125, %v892
      %v1160 = vsel %vm1146, %v1127, %v894
      %v1162 = vsel %vm1146, %v1129, %v896
      %v1164 = vsel %vm1146, %v1131, %v898
      %v1166 = vsel %vm1146, %v1133, %v900
      %v1168 = vsel %vm1146, %v1135, %v902
      %v1170 = vsel %vm1146, %v1137, %v904
      %v1172 = vsel %vm1146, %v1139, %v906
      %v1174 = vsel %vm1146, %v1141, %v908
      %v1176 = vsel %vm1146, %v1143, %v910
      %v1178 = vsel %vm1146, %v1145, %v912
      %vm1179 = vcmask 261120
      %v1181 = vsel %vm1179, %v1148, %v917
      %v1183 = vsel %vm1179, %v1150, %v919
      %v1185 = vsel %vm1179, %v1152, %v921
      %v1187 = vsel %vm1179, %v1154, %v923
      %v1189 = vsel %vm1179, %v1156, %v925
      %v1191 = vsel %vm1179, %v1158, %v927
      %v1193 = vsel %vm1179, %v1160, %v929
      %v1195 = vsel %vm1179, %v1162, %v931
      %v1197 = vsel %vm1179, %v1164, %v933
      %v1199 = vsel %vm1179, %v1166, %v935
      %v1201 = vsel %vm1179, %v1168, %v937
      %v1203 = vsel %vm1179, %v1170, %v939
      %v1205 = vsel %vm1179, %v1172, %v941
      %v1207 = vsel %vm1179, %v1174, %v943
      %v1209 = vsel %vm1179, %v1176, %v945
      %v1211 = vsel %vm1179, %v1178, %v947
      %v1212 = vld [vmem:[%s1] sm:$0xf]
      %v1213 = vld [vmem:[%s1 + $0x4] sm:$0xf]
      %v1214 = vld [vmem:[%s1 + $0x8] sm:$0xf]
      %v1215 = vld [vmem:[%s1 + $0xc] sm:$0xf]
      %v1216 = vld [vmem:[%s1 + $0x10] sm:$0x3]
      %v1217 = vld [vmem:[%s2] sm:$0x1]
      %v1219 = vlaneseq
      %v1220 = vshrl.u32 %v1219, 7
      %v1221 = vsub.s32 0, %v1220
      %v1222 = vrot.slane %v1217, %v1221
      %v1229 = vunpack.c.l.b16 %v1212
      %v1230 = vunpack.c.l.b16 %v1213
      %v1231 = vunpack.c.l.b16 %v1214
      %v1232 = vunpack.c.l.b16 %v1215
      %v1233 = vunpack.c.l.b16 %v1216
      %v1234 = vpack.c.b16 %v1230, %v1229
      %v1235 = vpack.c.b16 %v1232, %v1231
      %v1236 = vpack.c.b16 %v1233, %v1233
      %vm1239 = vcmask 293888
      %v1240 = vsel %vm1239, %v1181, 0
      %v1242 = vsel %vm1239, %v1183, 0
      %v1244 = vsel %vm1239, %v1185, 0
      %v1246 = vsel %vm1239, %v1187, 0
      %v1248 = vsel %vm1239, %v1189, 0
      %v1250 = vsel %vm1239, %v1191, 0
      %v1252 = vsel %vm1239, %v1193, 0
      %v1254 = vsel %vm1239, %v1195, 0
      %v1256 = vsel %vm1239, %v1197, 0
      %v1258 = vsel %vm1239, %v1199, 0
      %v1260 = vsel %vm1239, %v1201, 0
      %v1262 = vsel %vm1239, %v1203, 0
      %v1264 = vsel %vm1239, %v1205, 0
      %v1266 = vsel %vm1239, %v1207, 0
      %v1268 = vsel %vm1239, %v1209, 0
      %v1270 = vsel %vm1239, %v1211, 0
      %vm1272 = vcmask 1041408
      %v1274 = vsel %vm1272, %v1236, 0
      %1276 = vmatprep.subr.bf16.mxu0 0
      %1277 = vmatpush1.bf16.msra.mxu0 %v1234
      %1278 = vmatprep.subr.bf16.mxu0 0
      %1279 = vmatpush1.bf16.msra.mxu0 %v1235
      %1280 = vmatprep.subr.bf16.mxu0 0
      %1281 = vmatpush1.bf16.msra.mxu0 %v1274
      %1282 = vmatprep.subr.bf16.mxu0 0
      %1283 = vmatpush1.bf16.msra.mxu0 0
      %1284 = vmatprep.subr.bf16.mxu0 0
      %1285 = vmatpush1.bf16.msra.mxu0 0
      %1286 = vmatprep.subr.bf16.mxu0 0
      %1287 = vmatpush1.bf16.msra.mxu0 0
      %1288 = vmatprep.subr.bf16.mxu0 0
      %1289 = vmatpush1.bf16.msra.mxu0 0
      %1290 = vmatprep.subr.bf16.mxu0 0
      %1291 = vmatpush1.bf16.msra.mxu0 0
      %1292 = vmatprep.subr.bf16.mxu0 0
      %1293 = vmatpush1.bf16.msra.mxu0 0
      %1294 = vmatprep.subr.bf16.mxu0 0
      %1295 = vmatpush1.bf16.msra.mxu0 0
      %1296 = vmatprep.subr.bf16.mxu0 0
      %1297 = vmatpush1.bf16.msra.mxu0 0
      %1298 = vmatprep.subr.bf16.mxu0 0
      %1299 = vmatpush1.bf16.msra.mxu0 0
      %1300 = vmatprep.subr.bf16.mxu0 0
      %1301 = vmatpush1.bf16.msra.mxu0 0
      %1302 = vmatprep.subr.bf16.mxu0 0
      %1303 = vmatpush1.bf16.msra.mxu0 0
      %1304 = vmatprep.subr.bf16.mxu0 0
      %1305 = vmatpush1.bf16.msra.mxu0 0
      %1306 = vmatprep.subr.bf16.mxu0 0
      %1307 = vmatpush1.bf16.msra.mxu0 0
      %1308 = vmatprep.mubr.bf16.mxu0 0
      %1309 = vmatmul.mubr.bf16.gmra.mrb[0].mxu0 %v1240
      %v1310 = vpop.f32.mrb[0].mxu0
      %v1311 = vadd.f32 %v1222, %v1310
      %v1312 = vpop.f32.mrb[0].mxu0
      %v1313 = vpop.f32.mrb[0].mxu0
      %v1314 = vadd.f32 %v1222, %v1313
      %v1315 = vpop.f32.mrb[0].mxu0
      %1316 = vmatprep.mubr.bf16.mxu0 0
      %1317 = vmatmul.mubr.bf16.gmra.mrb[0].mxu0 %v1242
      %v1318 = vpop.f32.mrb[0].mxu0
      %v1319 = vadd.f32 %v1222, %v1318
      %v1320 = vpop.f32.mrb[0].mxu0
      %v1321 = vpop.f32.mrb[0].mxu0
      %v1322 = vadd.f32 %v1222, %v1321
      %v1323 = vpop.f32.mrb[0].mxu0
      %1324 = vmatprep.mubr.bf16.mxu0 0
      %1325 = vmatmul.mubr.bf16.gmra.mrb[0].mxu0 %v1244
      %v1326 = vpop.f32.mrb[0].mxu0
      %v1327 = vadd.f32 %v1222, %v1326
      %v1328 = vpop.f32.mrb[0].mxu0
      %v1329 = vpop.f32.mrb[0].mxu0
      %v1330 = vadd.f32 %v1222, %v1329
      %v1331 = vpop.f32.mrb[0].mxu0
      %1332 = vmatprep.mubr.bf16.mxu0 0
      %1333 = vmatmul.mubr.bf16.gmra.mrb[0].mxu0 %v1246
      %v1334 = vpop.f32.mrb[0].mxu0
      %v1335 = vadd.f32 %v1222, %v1334
      %v1336 = vpop.f32.mrb[0].mxu0
      %v1337 = vpop.f32.mrb[0].mxu0
      %v1338 = vadd.f32 %v1222, %v1337
      %v1339 = vpop.f32.mrb[0].mxu0
      %1340 = vmatprep.mubr.bf16.mxu0 0
      %1341 = vmatmul.mubr.bf16.gmra.mrb[0].mxu0 %v1248
      %v1342 = vpop.f32.mrb[0].mxu0
      %v1343 = vadd.f32 %v1222, %v1342
      %v1344 = vpop.f32.mrb[0].mxu0
      %v1345 = vpop.f32.mrb[0].mxu0
      %v1346 = vadd.f32 %v1222, %v1345
      %v1347 = vpop.f32.mrb[0].mxu0
      %1348 = vmatprep.mubr.bf16.mxu0 0
      %1349 = vmatmul.mubr.bf16.gmra.mrb[0].mxu0 %v1250
      %v1350 = vpop.f32.mrb[0].mxu0
      %v1351 = vadd.f32 %v1222, %v1350
      %v1352 = vpop.f32.mrb[0].mxu0
      %v1353 = vpop.f32.mrb[0].mxu0
      %v1354 = vadd.f32 %v1222, %v1353
      %v1355 = vpop.f32.mrb[0].mxu0
      %1356 = vmatprep.mubr.bf16.mxu0 0
      %1357 = vmatmul.mubr.bf16.gmra.mrb[0].mxu0 %v1252
      %v1358 = vpop.f32.mrb[0].mxu0
      %v1359 = vadd.f32 %v1222, %v1358
      %v1360 = vpop.f32.mrb[0].mxu0
      %v1361 = vpop.f32.mrb[0].mxu0
      %v1362 = vadd.f32 %v1222, %v1361
      %v1363 = vpop.f32.mrb[0].mxu0
      %1364 = vmatprep.mubr.bf16.mxu0 0
      %1365 = vmatmul.mubr.bf16.gmra.mrb[0].mxu0 %v1254
      %v1366 = vpop.f32.mrb[0].mxu0
      %v1367 = vadd.f32 %v1222, %v1366
      %v1368 = vpop.f32.mrb[0].mxu0
      %v1369 = vpop.f32.mrb[0].mxu0
      %v1370 = vadd.f32 %v1222, %v1369
      %v1371 = vpop.f32.mrb[0].mxu0
      %1372 = vmatprep.mubr.bf16.mxu0 0
      %1373 = vmatmul.mubr.bf16.gmra.mrb[0].mxu0 %v1256
      %v1374 = vpop.f32.mrb[0].mxu0
      %v1375 = vadd.f32 %v1222, %v1374
      %v1376 = vpop.f32.mrb[0].mxu0
      %v1377 = vpop.f32.mrb[0].mxu0
      %v1378 = vadd.f32 %v1222, %v1377
      %v1379 = vpop.f32.mrb[0].mxu0
      %1380 = vmatprep.mubr.bf16.mxu0 0
      %1381 = vmatmul.mubr.bf16.gmra.mrb[0].mxu0 %v1258
      %v1382 = vpop.f32.mrb[0].mxu0
      %v1383 = vadd.f32 %v1222, %v1382
      %v1384 = vpop.f32.mrb[0].mxu0
      %v1385 = vpop.f32.mrb[0].mxu0
      %v1386 = vadd.f32 %v1222, %v1385
      %v1387 = vpop.f32.mrb[0].mxu0
      %1388 = vmatprep.mubr.bf16.mxu0 0
      %1389 = vmatmul.mubr.bf16.gmra.mrb[0].mxu0 %v1260
      %v1390 = vpop.f32.mrb[0].mxu0
      %v1391 = vadd.f32 %v1222, %v1390
      %v1392 = vpop.f32.mrb[0].mxu0
      %v1393 = vpop.f32.mrb[0].mxu0
      %v1394 = vadd.f32 %v1222, %v1393
      %v1395 = vpop.f32.mrb[0].mxu0
      %1396 = vmatprep.mubr.bf16.mxu0 0
      %1397 = vmatmul.mubr.bf16.gmra.mrb[0].mxu0 %v1262
      %v1398 = vpop.f32.mrb[0].mxu0
      %v1399 = vadd.f32 %v1222, %v1398
      %v1400 = vpop.f32.mrb[0].mxu0
      %v1401 = vpop.f32.mrb[0].mxu0
      %v1402 = vadd.f32 %v1222, %v1401
      %v1403 = vpop.f32.mrb[0].mxu0
      %1404 = vmatprep.mubr.bf16.mxu0 0
      %1405 = vmatmul.mubr.bf16.gmra.mrb[0].mxu0 %v1264
      %v1406 = vpop.f32.mrb[0].mxu0
      %v1407 = vadd.f32 %v1222, %v1406
      %v1408 = vpop.f32.mrb[0].mxu0
      %v1409 = vpop.f32.mrb[0].mxu0
      %v1410 = vadd.f32 %v1222, %v1409
      %v1411 = vpop.f32.mrb[0].mxu0
      %1412 = vmatprep.mubr.bf16.mxu0 0
      %1413 = vmatmul.mubr.bf16.gmra.mrb[0].mxu0 %v1266
      %v1414 = vpop.f32.mrb[0].mxu0
      %v1415 = vadd.f32 %v1222, %v1414
      %v1416 = vpop.f32.mrb[0].mxu0
      %v1417 = vpop.f32.mrb[0].mxu0
      %v1418 = vadd.f32 %v1222, %v1417
      %v1419 = vpop.f32.mrb[0].mxu0
      %1420 = vmatprep.mubr.bf16.mxu0 0
      %1421 = vmatmul.mubr.bf16.gmra.mrb[0].mxu0 %v1268
      %v1422 = vpop.f32.mrb[0].mxu0
      %v1423 = vadd.f32 %v1222, %v1422
      %v1424 = vpop.f32.mrb[0].mxu0
      %v1425 = vpop.f32.mrb[0].mxu0
      %v1426 = vadd.f32 %v1222, %v1425
      %v1427 = vpop.f32.mrb[0].mxu0
      %1428 = vmatprep.mubr.bf16.mxu0 0
      %1429 = vmatmul.mubr.bf16.gmra.mrb[0].mxu0 %v1270
      %v1430 = vpop.f32.mrb[0].mxu0
      %v1431 = vadd.f32 %v1222, %v1430
      %v1432 = vpop.f32.mrb[0].mxu0
      %v1433 = vpop.f32.mrb[0].mxu0
      %v1434 = vadd.f32 %v1222, %v1433
      %v1435 = vpop.f32.mrb[0].mxu0
      %1436 = vdwg.mxu0
      %v1437 = vmax.f32 %v1311, 0.0
      %v1438 = vmax.f32 %v1314, 0.0
      %v1439 = vmax.f32 %v1319, 0.0
      %v1440 = vmax.f32 %v1322, 0.0
      %v1441 = vmax.f32 %v1327, 0.0
      %v1442 = vmax.f32 %v1330, 0.0
      %v1443 = vmax.f32 %v1335, 0.0
      %v1444 = vmax.f32 %v1338, 0.0
      %v1445 = vmax.f32 %v1343, 0.0
      %v1446 = vmax.f32 %v1346, 0.0
      %v1447 = vmax.f32 %v1351, 0.0
      %v1448 = vmax.f32 %v1354, 0.0
      %v1449 = vmax.f32 %v1359, 0.0
      %v1450 = vmax.f32 %v1362, 0.0
      %v1451 = vmax.f32 %v1367, 0.0
      %v1452 = vmax.f32 %v1370, 0.0
      %v1453 = vmax.f32 %v1375, 0.0
      %v1454 = vmax.f32 %v1378, 0.0
      %v1455 = vmax.f32 %v1383, 0.0
      %v1456 = vmax.f32 %v1386, 0.0
      %v1457 = vmax.f32 %v1391, 0.0
      %v1458 = vmax.f32 %v1394, 0.0
      %v1459 = vmax.f32 %v1399, 0.0
      %v1460 = vmax.f32 %v1402, 0.0
      %v1461 = vmax.f32 %v1407, 0.0
      %v1462 = vmax.f32 %v1410, 0.0
      %v1463 = vmax.f32 %v1415, 0.0
      %v1464 = vmax.f32 %v1418, 0.0
      %v1465 = vmax.f32 %v1423, 0.0
      %v1466 = vmax.f32 %v1426, 0.0
      %v1467 = vmax.f32 %v1431, 0.0
      %v1468 = vmax.f32 %v1434, 0.0
      %v1469 = vadd.f32 %v1437, %v1438
      %v1470 = vadd.f32 %v1469, %v1439
      %v1471 = vadd.f32 %v1470, %v1440
      %v1472 = vadd.f32 %v1471, %v1441
      %v1473 = vadd.f32 %v1472, %v1442
      %v1474 = vadd.f32 %v1473, %v1443
      %v1475 = vadd.f32 %v1474, %v1444
      %v1476 = vadd.f32 %v1475, %v1445
      %v1477 = vadd.f32 %v1476, %v1446
      %v1478 = vadd.f32 %v1477, %v1447
      %v1479 = vadd.f32 %v1478, %v1448
      %v1480 = vadd.f32 %v1479, %v1449
      %v1481 = vadd.f32 %v1480, %v1450
      %v1482 = vadd.f32 %v1481, %v1451
      %v1483 = vadd.f32 %v1482, %v1452
      %v1484 = vadd.f32 %v1483, %v1453
      %v1485 = vadd.f32 %v1484, %v1454
      %v1486 = vadd.f32 %v1485, %v1455
      %v1487 = vadd.f32 %v1486, %v1456
      %v1488 = vadd.f32 %v1487, %v1457
      %v1489 = vadd.f32 %v1488, %v1458
      %v1490 = vadd.f32 %v1489, %v1459
      %v1491 = vadd.f32 %v1490, %v1460
      %v1492 = vadd.f32 %v1491, %v1461
      %v1493 = vadd.f32 %v1492, %v1462
      %v1494 = vadd.f32 %v1493, %v1463
      %v1495 = vadd.f32 %v1494, %v1464
      %v1496 = vadd.f32 %v1495, %v1465
      %v1497 = vadd.f32 %v1496, %v1466
      %v1498 = vadd.f32 %v1497, %v1467
      %v1499 = vadd.f32 %v1498, %v1468
      %v1500 = vrot.slane %v1499, 4
      %v1501 = vadd.f32 %v1499, %v1500
      %v1502 = vrot.slane %v1501, 2
      %v1503 = vadd.f32 %v1501, %v1502
      %v1504 = vrot.slane %v1503, 1
      %v1505 = vadd.f32 %v1503, %v1504
      %v1506 = vpack.c.bf16 %v1505, %v1505
      %v1507 = vld [vmem:[%s3] sm:$0xf]
      %v1508 = vld [vmem:[%s3 + $0x4] sm:$0xf]
      %v1509 = vld [vmem:[%s3 + $0x8] sm:$0xf]
      %v1510 = vld [vmem:[%s3 + $0xc] sm:$0xf]
      %v1511 = vld [vmem:[%s3 + $0x10] sm:$0xf]
      %v1512 = vld [vmem:[%s3 + $0x14] sm:$0xf]
      %v1513 = vld [vmem:[%s3 + $0x18] sm:$0xf]
      %v1514 = vld [vmem:[%s3 + $0x1c] sm:$0xf]
      %v1515 = vld [vmem:[%s3 + $0x20] sm:$0xf]
      %v1516 = vld [vmem:[%s3 + $0x24] sm:$0xf]
      %v1517 = vld [vmem:[%s3 + $0x28] sm:$0xf]
      %v1518 = vld [vmem:[%s3 + $0x2c] sm:$0xf]
      %v1519 = vld [vmem:[%s3 + $0x30] sm:$0xf]
      %v1520 = vld [vmem:[%s3 + $0x34] sm:$0xf]
      %v1521 = vld [vmem:[%s3 + $0x38] sm:$0xf]
      %v1522 = vld [vmem:[%s3 + $0x3c] sm:$0xf]
      %v1523 = vld [vmem:[%s4] sm:$0x1]
      %v1540 = vunpack.c.l.b16 %v1507
      %v1541 = vunpack.c.l.b16 %v1508
      %v1542 = vunpack.c.l.b16 %v1509
      %v1543 = vunpack.c.l.b16 %v1510
      %v1544 = vunpack.c.l.b16 %v1511
      %v1545 = vunpack.c.l.b16 %v1512
      %v1546 = vunpack.c.l.b16 %v1513
      %v1547 = vunpack.c.l.b16 %v1514
      %v1548 = vunpack.c.l.b16 %v1515
      %v1549 = vunpack.c.l.b16 %v1516
      %v1550 = vunpack.c.l.b16 %v1517
      %v1551 = vunpack.c.l.b16 %v1518
      %v1552 = vunpack.c.l.b16 %v1519
      %v1553 = vunpack.c.l.b16 %v1520
      %v1554 = vunpack.c.l.b16 %v1521
      %v1555 = vunpack.c.l.b16 %v1522
      %v1556 = vpack.c.b16 %v1541, %v1540
      %v1557 = vpack.c.b16 %v1543, %v1542
      %v1558 = vpack.c.b16 %v1545, %v1544
      %v1559 = vpack.c.b16 %v1547, %v1546
      %v1560 = vpack.c.b16 %v1549, %v1548
      %v1561 = vpack.c.b16 %v1551, %v1550
      %v1562 = vpack.c.b16 %v1553, %v1552
      %v1563 = vpack.c.b16 %v1555, %v1554
      %1572 = vmatprep.subr.bf16.mxu0 0
      %1573 = vmatpush1.bf16.msra.mxu0 %v1556
      %1574 = vmatprep.subr.bf16.mxu0 0
      %1575 = vmatpush1.bf16.msra.mxu0 %v1557
      %1576 = vmatprep.subr.bf16.mxu0 0
      %1577 = vmatpush1.bf16.msra.mxu0 %v1558
      %1578 = vmatprep.subr.bf16.mxu0 0
      %1579 = vmatpush1.bf16.msra.mxu0 %v1559
      %1580 = vmatprep.subr.bf16.mxu0 0
      %1581 = vmatpush1.bf16.msra.mxu0 %v1560
      %1582 = vmatprep.subr.bf16.mxu0 0
      %1583 = vmatpush1.bf16.msra.mxu0 %v1561
      %1584 = vmatprep.subr.bf16.mxu0 0
      %1585 = vmatpush1.bf16.msra.mxu0 %v1562
      %1586 = vmatprep.subr.bf16.mxu0 0
      %1587 = vmatpush1.bf16.msra.mxu0 %v1563
      %1588 = vmatprep.subr.bf16.mxu0 0
      %1589 = vmatpush1.bf16.msra.mxu0 0
      %1590 = vmatprep.subr.bf16.mxu0 0
      %1591 = vmatpush1.bf16.msra.mxu0 0
      %1592 = vmatprep.subr.bf16.mxu0 0
      %1593 = vmatpush1.bf16.msra.mxu0 0
      %1594 = vmatprep.subr.bf16.mxu0 0
      %1595 = vmatpush1.bf16.msra.mxu0 0
      %1596 = vmatprep.subr.bf16.mxu0 0
      %1597 = vmatpush1.bf16.msra.mxu0 0
      %1598 = vmatprep.subr.bf16.mxu0 0
      %1599 = vmatpush1.bf16.msra.mxu0 0
      %1600 = vmatprep.subr.bf16.mxu0 0
      %1601 = vmatpush1.bf16.msra.mxu0 0
      %1602 = vmatprep.subr.bf16.mxu0 0
      %1603 = vmatpush1.bf16.msra.mxu0 0
      %1604 = vmatprep.mubr.bf16.mxu0 0
      %1605 = vmatmul.mubr.bf16.gmra.mrb[0].mxu0 %v1506
      %v1606 = vpop.f32.mrb[0].mxu0
      %v1607 = vadd.f32 %v1523, %v1606
      %v1608 = vpop.f32.mrb[0].mxu0
      %v1609 = vpop.f32.mrb[0].mxu0
      %v1610 = vpop.f32.mrb[0].mxu0
      %1611 = vdwg.mxu0
      %v1612 = vpack.c.bf16 %v1607, %v1607
      %vm1613 = vcmask 1040384
      %vm1614 = vsmask.f32 256
      %vm1615 = vmand %vm1613, %vm1614
      %v1616 = vld [vmem:[%s220] sm:$0x1]
      %v1617 = vsel %vm1615, %v1612, %v1616
      %1618 = vst [vmem:[%s220] sm:$0x1] %v1617
      %p1619 = scmp.lt.s32.totalorder %s16, 1
      %s1620 = scalar_select %p1619, %s16, 1
      %s1621 = scalar_lea.vmem %s5, %s1620
      // Predicated region
      $region41: #{tpu_custom_call.1} parent=39 // pred_check
        %p1622 = pneg %p144
      $region42: #{tpu_custom_call.1} parent=39 // pred_check_branch
        %1624 = sbr.rel (%p1622) target = $region44
      $region43: #{tpu_custom_call.1} parent=39 // pred_region
        _
      $region44: #{tpu_custom_call.1} parent=39 // pred_fallthru
        _
    $region40: #{tpu_custom_call.1} parent=5 // pred_fallthru
      _
    %p1625 = scmp.le.s32.totalorder 2, %s11
    // Predicated region
    $region45: #{tpu_custom_call.1} parent=5 // pred_check
      %p1626 = pneg %p1625
    $region46: #{tpu_custom_call.1} parent=5 // pred_check_branch
      %1628 = sbr.rel (%p1626) target = $region48
    $region47: #{tpu_custom_call.1} parent=5 // pred_region
      %s1629 = ssub.s32 %s11, 2
      // Predicated region
      $region49: #{tpu_custom_call.1} parent=47 // pred_check
        %p1630 = pneg %p150
      $region50: #{tpu_custom_call.1} parent=47 // pred_check_branch
        %1632 = sbr.rel (%p1630) target = $region52
      $region51: #{tpu_custom_call.1} parent=47 // pred_region
        %p1633 = scmp.lt.s32.totalorder %s17, 1
        %s1634 = scalar_select %p1633, %s17, 1
        %s1635 = scalar_lea.vmem %s5, %s1634
      $region52: #{tpu_custom_call.1} parent=47 // pred_fallthru
        _
    $region48: #{tpu_custom_call.1} parent=5 // pred_fallthru
      _
  $region6: #{tpu_custom_call.1} parent=0 // loop_footer
    %s15 = sadd.s32 1, %s11
  $region7: #{tpu_custom_call.1} parent=0 // loop_footer_branch
    %10 = sbr.rel target = $region3
  $region8: #{tpu_custom_call.1} parent=0 // loop_exit
    _

</llo_original>
